<compile_context>
chip_gen: v5e
topology: v5e:2x2
jax: 0.10.0
libtpu: 0.0.40
codegen_flags: <defaults>
</compile_context>

<pallas_src>
import math

import jax
import jax.numpy as jnp
from jax import lax
from jax.experimental import pallas as pl
from jax.experimental.pallas import tpu as pltpu

# ---------------- config (small, consistent with the module) ----------------
BATCH = 2
SEQ = 8
HIDDEN = 32
NUM_HEADS = 4
HEAD_DIM = HIDDEN // NUM_HEADS           # attention_head_size
ALL_HEAD = NUM_HEADS * HEAD_DIM          # all_head_size == HIDDEN here
LN_EPS = 1e-12                           # HF QFormer default layer_norm_eps
NUM_G = 3 * NUM_HEADS                    # (q,k,v) x heads packed on a leading axis


def attention_layer_kernel(
    x_ref,       # (1, S, H)            one batch element
    wg_ref,      # (3*NH, H, d)         [q heads | k heads | v heads], q pre-scaled
    bg_ref,      # (3*NH, 1, d)         matching biases, q pre-scaled
    wo_ref,      # (ALL_HEAD, H)        output projection
    lnp_ref,     # (3, H)               rows = [bo, gamma, beta]
    out_ref,     # (1, S, H)
):
    x = x_ref[0]                                                   # (S, H) f32

    # ---- QKV projection, head-batched on a leading axis (no lane-offset slices) ----
    xg = jnp.broadcast_to(x, (NUM_G, SEQ, HIDDEN))                 # (3NH, S, H)
    qkv = jnp.einsum("gsh,ghd->gsd", xg, wg_ref[...],
                     preferred_element_type=jnp.float32) + bg_ref[...]   # (3NH, S, d)
    q = qkv[0 * NUM_HEADS:1 * NUM_HEADS]                           # (NH, S, d), scaled
    k = qkv[1 * NUM_HEADS:2 * NUM_HEADS]
    v = qkv[2 * NUM_HEADS:3 * NUM_HEADS]

    # ---- head-batched attention (flash-style batched dot_generals) ----
    s = jnp.einsum("nqd,nkd->nqk", q, k,
                   preferred_element_type=jnp.float32)             # (NH, S, S)
    s = s - jnp.max(s, axis=-1, keepdims=True)
    p = jnp.exp(s)
    p = p / jnp.sum(p, axis=-1, keepdims=True)                     # exact softmax
    ctx = jnp.einsum("nqk,nkd->nqd", p, v,
                     preferred_element_type=jnp.float32)           # (NH, S, d)

    # ---- assemble all heads and project with ONE K=ALL_HEAD MXU push ----
    ctx_flat = jnp.concatenate([ctx[h] for h in range(NUM_HEADS)], axis=-1)  # (S, A)
    proj = jnp.dot(ctx_flat, wo_ref[...],
                   preferred_element_type=jnp.float32)             # (S, H)

    # ---- Blip2QFormerSelfOutput: dense bias + residual + LayerNorm ----
    bo = lnp_ref[0:1, :]
    gamma = lnp_ref[1:2, :]
    beta = lnp_ref[2:3, :]
    y = proj + bo + x
    mean = jnp.mean(y, axis=-1, keepdims=True)
    yc = y - mean
    var = jnp.mean(yc * yc, axis=-1, keepdims=True)
    y = yc * lax.rsqrt(var + LN_EPS)
    out_ref[0] = (y * gamma + beta).astype(out_ref.dtype)


def pack_params(p):
    """One-time host-side repacking: head-major leading axes, scale folded into q."""
    inv_sqrt_d = 1.0 / math.sqrt(HEAD_DIM)

    def per_head_w(w):            # (H, A) -> (NH, H, d)
        return w.reshape(HIDDEN, NUM_HEADS, HEAD_DIM).transpose(1, 0, 2)

    def per_head_b(b):            # (1, A) -> (NH, 1, d)
        return b.reshape(NUM_HEADS, HEAD_DIM)[:, None, :]

    wg = jnp.concatenate(
        [per_head_w(p["wq"] * inv_sqrt_d), per_head_w(p["wk"]), per_head_w(p["wv"])],
        axis=0)                                                    # (3NH, H, d)
    bg = jnp.concatenate(
        [per_head_b(p["bq"] * inv_sqrt_d), per_head_b(p["bk"]), per_head_b(p["bv"])],
        axis=0)                                                    # (3NH, 1, d)
    return {
        "wg": wg,
        "bg": bg,
        "wo": p["wo"],                                             # (A, H)
        "lnp": jnp.concatenate([p["bo"], p["gamma"], p["beta"]], axis=0),  # (3, H)
    }


def attention_layer(x, packed):
    B, S, H = x.shape
    return pl.pallas_call(
        attention_layer_kernel,
        out_shape=jax.ShapeDtypeStruct((B, S, H), x.dtype),
        grid=(B,),
        in_specs=[
            pl.BlockSpec((1, S, H), lambda b: (b, 0, 0)),                  # x: per-batch
            pl.BlockSpec(packed["wg"].shape, lambda b: (0, 0, 0)),         # weights stay
            pl.BlockSpec(packed["bg"].shape, lambda b: (0, 0, 0)),         # resident in
            pl.BlockSpec(packed["wo"].shape, lambda b: (0, 0)),            # VMEM across
            pl.BlockSpec(packed["lnp"].shape, lambda b: (0, 0)),           # grid steps
        ],
        out_specs=pl.BlockSpec((1, S, H), lambda b: (b, 0, 0)),
        compiler_params=pltpu.CompilerParams(dimension_semantics=("parallel",)),
    )(x, packed["wg"], packed["bg"], packed["wo"], packed["lnp"])


def init_params(key):
    ks = jax.random.split(key, 8)
    scale = 0.02
    return {
        "wq": scale * jax.random.normal(ks[0], (HIDDEN, ALL_HEAD), jnp.float32),
        "bq": scale * jax.random.normal(ks[1], (1, ALL_HEAD), jnp.float32),
        "wk": scale * jax.random.normal(ks[2], (HIDDEN, ALL_HEAD), jnp.float32),
        "bk": scale * jax.random.normal(ks[3], (1, ALL_HEAD), jnp.float32),
        "wv": scale * jax.random.normal(ks[4], (HIDDEN, ALL_HEAD), jnp.float32),
        "bv": scale * jax.random.normal(ks[5], (1, ALL_HEAD), jnp.float32),
        "wo": scale * jax.random.normal(ks[6], (ALL_HEAD, HIDDEN), jnp.float32),
        "bo": scale * jax.random.normal(ks[7], (1, HIDDEN), jnp.float32),
        "gamma": jnp.ones((1, HIDDEN), jnp.float32),
        "beta": jnp.zeros((1, HIDDEN), jnp.float32),
    }


def reference(x, p):
    """Pure-JAX reference mirroring the PyTorch forward (eval mode)."""
    B, S, H = x.shape
    q = x @ p["wq"] + p["bq"][0]
    k = x @ p["wk"] + p["bk"][0]
    v = x @ p["wv"] + p["bv"][0]

    def split(t):  # (B, S, A) -> (B, nh, S, d)
        return t.reshape(B, S, NUM_HEADS, HEAD_DIM).transpose(0, 2, 1, 3)

    qh, kh, vh = split(q), split(k), split(v)
    scores = jnp.einsum("bhsd,bhtd->bhst", qh, kh) / math.sqrt(HEAD_DIM)
    probs = jax.nn.softmax(scores, axis=-1)
    ctx = jnp.einsum("bhst,bhtd->bhsd", probs, vh)
    ctx = ctx.transpose(0, 2, 1, 3).reshape(B, S, ALL_HEAD)
    y = ctx @ p["wo"] + p["bo"][0] + x
    mean = jnp.mean(y, axis=-1, keepdims=True)
    var = jnp.mean((y - mean) ** 2, axis=-1, keepdims=True)
    return (y - mean) / jnp.sqrt(var + LN_EPS) * p["gamma"][0] + p["beta"][0]


if __name__ == "__main__":
    key = jax.random.PRNGKey(0)
    kx, kp = jax.random.split(key)
    x = jax.random.normal(kx, (BATCH, SEQ, HIDDEN), jnp.float32)
    params = init_params(kp)
    packed = pack_params(params)

    out = attention_layer(x, packed)
    out = jax.block_until_ready(out)

    ref = reference(x, params)
    assert out.shape == (BATCH, SEQ, HIDDEN)
    max_err = float(jnp.max(jnp.abs(out - ref)))
    assert jnp.allclose(out, ref, atol=1e-4, rtol=1e-4), max_err
    print("KERNEL_OK")
</pallas_src>

<mosaic_0001>
module attributes {stable_mosaic.version = 11 : i64} {
  func.func @attention_layer_kernel(%arg0: i32, %arg1: memref<1x8x32xf32, #tpu.memory_space<vmem>>, %arg2: memref<12x32x8xf32, #tpu.memory_space<vmem>>, %arg3: memref<12x1x8xf32, #tpu.memory_space<vmem>>, %arg4: memref<32x32xf32, #tpu.memory_space<vmem>>, %arg5: memref<3x32xf32, #tpu.memory_space<vmem>>, %arg6: memref<1x8x32xf32, #tpu.memory_space<vmem>>) attributes {dimension_semantics = [#tpu.dimension_semantics<parallel>], iteration_bounds = array<i64: 2>, scalar_prefetch = 0 : i64, scratch_operands = 0 : i64, tpu.core_type = #tpu.core_type<tc>, window_params = [{transform_indices = @transform_0, window_bounds = array<i64: 1, 8, 32>}, {pipeline_mode = #tpu.pipeline_mode<synchronous>, transform_indices = @transform_1, window_bounds = array<i64: 12, 32, 8>}, {pipeline_mode = #tpu.pipeline_mode<synchronous>, transform_indices = @transform_2, window_bounds = array<i64: 12, 1, 8>}, {pipeline_mode = #tpu.pipeline_mode<synchronous>, transform_indices = @transform_3, window_bounds = array<i64: 32, 32>}, {pipeline_mode = #tpu.pipeline_mode<synchronous>, transform_indices = @transform_4, window_bounds = array<i64: 3, 32>}, {transform_indices = @transform_5, window_bounds = array<i64: 1, 8, 32>}]} {
    %c0 = arith.constant 0 : index
    %c0_0 = arith.constant 0 : index
    %c0_1 = arith.constant 0 : index
    %0 = vector.load %arg1[%c0, %c0_0, %c0_1] : memref<1x8x32xf32, #tpu.memory_space<vmem>>, vector<1x8x32xf32>
    %1 = vector.shape_cast %0 : vector<1x8x32xf32> to vector<8x32xf32>
    %2 = vector.shape_cast %1 : vector<8x32xf32> to vector<1x8x32xf32>
    %3 = vector.broadcast %2 : vector<1x8x32xf32> to vector<12x8x32xf32>
    %c0_2 = arith.constant 0 : index
    %c0_3 = arith.constant 0 : index
    %c0_4 = arith.constant 0 : index
    %4 = vector.load %arg2[%c0_2, %c0_3, %c0_4] : memref<12x32x8xf32, #tpu.memory_space<vmem>>, vector<12x32x8xf32>
    "tpu.trace_start"() <{level = 10 : i32, message = "gsh,ghd->gsd"}> : () -> ()
    %cst = arith.constant dense<0.000000e+00> : vector<12x8x8xf32>
    %5 = tpu.matmul %3, %4, %cst {dimension_numbers = #tpu.dot_dimension_numbers<[2], [1], [1], [2], [0, 0, 0, 1, 1, 2], [0], [0]>} : vector<12x8x32xf32>, vector<12x32x8xf32>, vector<12x8x8xf32> -> vector<12x8x8xf32>
    "tpu.trace_stop"() : () -> ()
    %c0_5 = arith.constant 0 : index
    %c0_6 = arith.constant 0 : index
    %c0_7 = arith.constant 0 : index
    %6 = vector.load %arg3[%c0_5, %c0_6, %c0_7] : memref<12x1x8xf32, #tpu.memory_space<vmem>>, vector<12x1x8xf32>
    %7 = vector.broadcast %6 : vector<12x1x8xf32> to vector<12x8x8xf32>
    %8 = arith.addf %5, %7 : vector<12x8x8xf32>
    %9 = vector.extract_strided_slice %8 {offsets = [0, 0, 0], sizes = [4, 8, 8], strides = [1, 1, 1]} : vector<12x8x8xf32> to vector<4x8x8xf32>
    %10 = vector.extract_strided_slice %8 {offsets = [4, 0, 0], sizes = [4, 8, 8], strides = [1, 1, 1]} : vector<12x8x8xf32> to vector<4x8x8xf32>
    %11 = vector.extract_strided_slice %8 {offsets = [8, 0, 0], sizes = [4, 8, 8], strides = [1, 1, 1]} : vector<12x8x8xf32> to vector<4x8x8xf32>
    "tpu.trace_start"() <{level = 10 : i32, message = "nqd,nkd->nqk"}> : () -> ()
    %cst_8 = arith.constant dense<0.000000e+00> : vector<4x8x8xf32>
    %12 = tpu.matmul %9, %10, %cst_8 {dimension_numbers = #tpu.dot_dimension_numbers<[2], [2], [1], [1], [0, 0, 0, 1, 1, 1], [0], [0]>} : vector<4x8x8xf32>, vector<4x8x8xf32>, vector<4x8x8xf32> -> vector<4x8x8xf32>
    "tpu.trace_stop"() : () -> ()
    %cst_9 = arith.constant dense<0xFF800000> : vector<4x8xf32>
    %13 = vector.multi_reduction <maximumf>, %12, %cst_9 [2] : vector<4x8x8xf32> to vector<4x8xf32>
    %14 = vector.shape_cast %13 : vector<4x8xf32> to vector<4x8x1xf32>
    %15 = vector.broadcast %14 : vector<4x8x1xf32> to vector<4x8x8xf32>
    %16 = arith.subf %12, %15 : vector<4x8x8xf32>
    %17 = math.exp %16 : vector<4x8x8xf32>
    %cst_10 = arith.constant dense<0.000000e+00> : vector<4x8xf32>
    %18 = vector.multi_reduction <add>, %17, %cst_10 [2] : vector<4x8x8xf32> to vector<4x8xf32>
    %19 = vector.shape_cast %18 : vector<4x8xf32> to vector<4x8x1xf32>
    %20 = vector.broadcast %19 : vector<4x8x1xf32> to vector<4x8x8xf32>
    %21 = arith.divf %17, %20 : vector<4x8x8xf32>
    "tpu.trace_start"() <{level = 10 : i32, message = "nqk,nkd->nqd"}> : () -> ()
    %cst_11 = arith.constant dense<0.000000e+00> : vector<4x8x8xf32>
    %22 = tpu.matmul %21, %11, %cst_11 {dimension_numbers = #tpu.dot_dimension_numbers<[2], [1], [1], [2], [0, 0, 0, 1, 1, 2], [0], [0]>} : vector<4x8x8xf32>, vector<4x8x8xf32>, vector<4x8x8xf32> -> vector<4x8x8xf32>
    "tpu.trace_stop"() : () -> ()
    %23 = vector.extract_strided_slice %22 {offsets = [0, 0, 0], sizes = [1, 8, 8], strides = [1, 1, 1]} : vector<4x8x8xf32> to vector<1x8x8xf32>
    %24 = vector.shape_cast %23 : vector<1x8x8xf32> to vector<8x8xf32>
    %25 = vector.extract_strided_slice %22 {offsets = [1, 0, 0], sizes = [1, 8, 8], strides = [1, 1, 1]} : vector<4x8x8xf32> to vector<1x8x8xf32>
    %26 = vector.shape_cast %25 : vector<1x8x8xf32> to vector<8x8xf32>
    %27 = vector.extract_strided_slice %22 {offsets = [2, 0, 0], sizes = [1, 8, 8], strides = [1, 1, 1]} : vector<4x8x8xf32> to vector<1x8x8xf32>
    %28 = vector.shape_cast %27 : vector<1x8x8xf32> to vector<8x8xf32>
    %29 = vector.extract_strided_slice %22 {offsets = [3, 0, 0], sizes = [1, 8, 8], strides = [1, 1, 1]} : vector<4x8x8xf32> to vector<1x8x8xf32>
    %30 = vector.shape_cast %29 : vector<1x8x8xf32> to vector<8x8xf32>
    %31 = tpu.concatenate %24, %26, %28, %30 in 1 : vector<8x8xf32>, vector<8x8xf32>, vector<8x8xf32>, vector<8x8xf32> -> vector<8x32xf32>
    %c0_12 = arith.constant 0 : index
    %c0_13 = arith.constant 0 : index
    %32 = vector.load %arg4[%c0_12, %c0_13] : memref<32x32xf32, #tpu.memory_space<vmem>>, vector<32x32xf32>
    %cst_14 = arith.constant dense<0.000000e+00> : vector<8x32xf32>
    %33 = tpu.matmul %31, %32, %cst_14 {dimension_numbers = #tpu.dot_dimension_numbers<[1], [0], [0], [1], [0, 0, 1, 1], [], []>} : vector<8x32xf32>, vector<32x32xf32>, vector<8x32xf32> -> vector<8x32xf32>
    %c0_15 = arith.constant 0 : index
    %c0_16 = arith.constant 0 : index
    %34 = vector.load %arg5[%c0_15, %c0_16] : memref<3x32xf32, #tpu.memory_space<vmem>>, vector<1x32xf32>
    %c1 = arith.constant 1 : index
    %c0_17 = arith.constant 0 : index
    %35 = vector.load %arg5[%c1, %c0_17] : memref<3x32xf32, #tpu.memory_space<vmem>>, vector<1x32xf32>
    %c2 = arith.constant 2 : index
    %c0_18 = arith.constant 0 : index
    %36 = vector.load %arg5[%c2, %c0_18] : memref<3x32xf32, #tpu.memory_space<vmem>>, vector<1x32xf32>
    %37 = vector.broadcast %34 : vector<1x32xf32> to vector<8x32xf32>
    %38 = arith.addf %33, %37 : vector<8x32xf32>
    %39 = arith.addf %38, %1 : vector<8x32xf32>
    %cst_19 = arith.constant dense<0.000000e+00> : vector<8xf32>
    %40 = vector.multi_reduction <add>, %39, %cst_19 [1] : vector<8x32xf32> to vector<8xf32>
    %41 = vector.shape_cast %40 : vector<8xf32> to vector<8x1xf32>
    %cst_20 = arith.constant 3.200000e+01 : f32
    %42 = vector.broadcast %cst_20 : f32 to vector<8x1xf32>
    %43 = arith.divf %41, %42 : vector<8x1xf32>
    %44 = vector.broadcast %43 : vector<8x1xf32> to vector<8x32xf32>
    %45 = arith.subf %39, %44 : vector<8x32xf32>
    %46 = arith.mulf %45, %45 : vector<8x32xf32>
    %cst_21 = arith.constant dense<0.000000e+00> : vector<8xf32>
    %47 = vector.multi_reduction <add>, %46, %cst_21 [1] : vector<8x32xf32> to vector<8xf32>
    %48 = vector.shape_cast %47 : vector<8xf32> to vector<8x1xf32>
    %cst_22 = arith.constant 3.200000e+01 : f32
    %49 = vector.broadcast %cst_22 : f32 to vector<8x1xf32>
    %50 = arith.divf %48, %49 : vector<8x1xf32>
    %cst_23 = arith.constant 9.99999996E-13 : f32
    %51 = vector.broadcast %cst_23 : f32 to vector<8x1xf32>
    %52 = arith.addf %50, %51 : vector<8x1xf32>
    %53 = math.rsqrt %52 : vector<8x1xf32>
    %54 = vector.broadcast %53 : vector<8x1xf32> to vector<8x32xf32>
    %55 = arith.mulf %45, %54 : vector<8x32xf32>
    %56 = vector.broadcast %35 : vector<1x32xf32> to vector<8x32xf32>
    %57 = arith.mulf %55, %56 : vector<8x32xf32>
    %58 = vector.broadcast %36 : vector<1x32xf32> to vector<8x32xf32>
    %59 = arith.addf %57, %58 : vector<8x32xf32>
    %c0_24 = arith.constant 0 : index
    %c0_25 = arith.constant 0 : index
    %c0_26 = arith.constant 0 : index
    %60 = vector.load %arg6[%c0_24, %c0_25, %c0_26] : memref<1x8x32xf32, #tpu.memory_space<vmem>>, vector<1x8x32xf32>
    %61 = vector.shape_cast %60 : vector<1x8x32xf32> to vector<8x32xf32>
    %62 = vector.shape_cast %59 : vector<8x32xf32> to vector<1x8x32xf32>
    tpu.vector_store %arg6[%c0_24, %c0_25, %c0_26], %62 {strides = array<i32>} : memref<1x8x32xf32, #tpu.memory_space<vmem>>, vector<1x8x32xf32>,
    return
  }
  func.func @transform_0(%arg0: i32) -> (i32, i32, i32) {
    %c0_i32 = arith.constant 0 : i32
    %c0_i32_0 = arith.constant 0 : i32
    %c0_i32_1 = arith.constant 0 : i32
    return %arg0, %c0_i32, %c0_i32_0 : i32, i32, i32
  }
  func.func @transform_1(%arg0: i32) -> (i32, i32, i32) {
    %c0_i32 = arith.constant 0 : i32
    %c0_i32_0 = arith.constant 0 : i32
    %c0_i32_1 = arith.constant 0 : i32
    %c0_i32_2 = arith.constant 0 : i32
    return %c0_i32, %c0_i32_0, %c0_i32_1 : i32, i32, i32
  }
  func.func @transform_2(%arg0: i32) -> (i32, i32, i32) {
    %c0_i32 = arith.constant 0 : i32
    %c0_i32_0 = arith.constant 0 : i32
    %c0_i32_1 = arith.constant 0 : i32
    %c0_i32_2 = arith.constant 0 : i32
    return %c0_i32, %c0_i32_0, %c0_i32_1 : i32, i32, i32
  }
  func.func @transform_3(%arg0: i32) -> (i32, i32) {
    %c0_i32 = arith.constant 0 : i32
    %c0_i32_0 = arith.constant 0 : i32
    %c0_i32_1 = arith.constant 0 : i32
    return %c0_i32, %c0_i32_0 : i32, i32
  }
  func.func @transform_4(%arg0: i32) -> (i32, i32) {
    %c0_i32 = arith.constant 0 : i32
    %c0_i32_0 = arith.constant 0 : i32
    %c0_i32_1 = arith.constant 0 : i32
    return %c0_i32, %c0_i32_0 : i32, i32
  }
  func.func @transform_5(%arg0: i32) -> (i32, i32, i32) {
    %c0_i32 = arith.constant 0 : i32
    %c0_i32_0 = arith.constant 0 : i32
    %c0_i32_1 = arith.constant 0 : i32
    return %arg0, %c0_i32, %c0_i32_0 : i32, i32, i32
  }
}

</mosaic_0001>

<llo_original>
// kernel: tpu_custom_call.1
$region0: #{tpu_custom_call.1}
  #allocation0 [shape = 'u32[]', space=smem, size = 0x4, offset = 0x4, fixed_abs, tag = 'smem constant byte address 0x4 - core index']
  #allocation1 [shape = 'u32[72,128]{1,0:T(1,128)}', space=vmem, size = 0x9000, scoped, tag = 'internal scratch']
  %s0 = inlined_call_operand.vmem [shape: f32[2,8,32], index: 0, kind: input, shape index: {}]
  %s1 = inlined_call_operand.vmem [shape: f32[12,32,8], index: 1, kind: input, shape index: {}]
  %s2 = inlined_call_operand.vmem [shape: f32[12,1,8], index: 2, kind: input, shape index: {}]
  %s3 = inlined_call_operand.vmem [shape: f32[32,32], index: 3, kind: input, shape index: {}]
  %s4 = inlined_call_operand.vmem [shape: f32[3,32], index: 4, kind: input, shape index: {}]
  %s5 = inlined_call_operand.hbm [shape: f32[2,8,32], index: 5, kind: output, shape index: {}]
  %s6 = sld [smem:[#allocation0]]
  $region53: #{tpu_custom_call.1} parent=0
    _
  %s8 = ssub.s32 1, %s6
  %s9 = scalar_select 0, %s8, %s6
  $region1: #{tpu_custom_call.1} parent=0
    #allocation2 [shape = 'u8[8192]{0}', space=vmem, size = 0x2000, scoped, tag = 'output window, operand 0']
    #allocation3 [shape = 's32[2]{0}', space=sflag, size = 0x8, scoped, tag = 'scoped memory for tpu_custom_call.1']
    %10 = vsyncpa [#allocation3], 0
    %s11 = scalar_lea.sflag [#allocation3], 1
    %12 = vsyncpa %s11, 0
    loop: start=0, step=1, limit=4
    $region2: #{tpu_custom_call.1} parent=1 // loop_pre_header
      _
    $region3: #{tpu_custom_call.1} parent=1 // loop_header
      %s14 = sphi 0, %s18
      %p15 = scmp.ge.s32.totalorder %s14, 4
      %s24 = sphi 0, %s26
      %s27 = sphi 0, %s24
      %s28 = sphi 0, %s27
      %s44 = sphi 0, %s28
      %s48 = sphi 0, %s48
      %s50 = sphi 0, %s48
      %s51 = sphi 0, %s50
      %s65 = sphi 0, %s51
      %s69 = sphi 0, %s69
      %s71 = sphi 0, %s69
      %s72 = sphi 0, %s71
      %s86 = sphi 0, %s72
      %s90 = sphi 0, %s90
      %s92 = sphi 0, %s90
      %s93 = sphi 0, %s92
      %s107 = sphi 0, %s93
      %s111 = sphi 0, %s111
      %s113 = sphi 0, %s111
      %s114 = sphi 0, %s113
      %s128 = sphi 0, %s114
      %s134 = sphi 0, %s136
      %s137 = sphi 0, %s134
      %s138 = sphi 0, %s137
      %s154 = sphi 0, %s138
    $region4: #{tpu_custom_call.1} parent=1 // loop_header_branch
      %17 = sbr.rel (%p15) target = $region8
    $region5: #{tpu_custom_call.1} parent=1 // loop_body
      %s19 = ssub.s32 %s14, 1
      %s20 = ssub.s32 %s14, 2
      %s21 = sadd.s32 %s14, 1
      %s22 = ssub.s32 %s14, %s21
      %p23 = scmp.eq.s32.totalorder %s22, 0
      %s25 = sadd.s32 %s24, 1
      %s26 = scalar_select %p23, %s24, %s25
      %p29 = pneg %p23
      %p30 = scmp.eq.s32.totalorder %s14, 1
      %p31 = por %p29, %p30
      %p32 = scmp.ne.s32.totalorder %s24, %s27
      %p33 = scmp.eq.s32.totalorder %s14, 0
      %p34 = por %p32, %p33
      %p35 = scmp.ne.s32.totalorder %s24, %s27
      %p36 = scmp.eq.s32.totalorder %s19, 1
      %p37 = por %p35, %p36
      %p38 = scmp.ne.s32.totalorder %s27, %s28
      %p39 = scmp.eq.s32.totalorder %s19, 0
      %p40 = por %p38, %p39
      %p41 = scmp.ne.s32.totalorder %s27, %s28
      %p42 = scmp.eq.s32.totalorder %s20, 1
      %p43 = por %p41, %p42
      %p45 = scmp.ne.s32.totalorder %s28, %s44
      %p46 = scmp.eq.s32.totalorder %s20, 0
      %p47 = por %p45, %p46
      %s49 = sadd.s32 %s48, 1
      %p52 = scmp.eq.s32.totalorder %s14, 1
      %p53 = scmp.ne.s32.totalorder %s48, %s50
      %p54 = scmp.eq.s32.totalorder %s14, 0
      %p55 = por %p53, %p54
      %p56 = scmp.ne.s32.totalorder %s48, %s50
      %p57 = scmp.eq.s32.totalorder %s19, 1
      %p58 = por %p56, %p57
      %p59 = scmp.ne.s32.totalorder %s50, %s51
      %p60 = scmp.eq.s32.totalorder %s19, 0
      %p61 = por %p59, %p60
      %p62 = scmp.ne.s32.totalorder %s50, %s51
      %p63 = scmp.eq.s32.totalorder %s20, 1
      %p64 = por %p62, %p63
      %p66 = scmp.ne.s32.totalorder %s51, %s65
      %p67 = scmp.eq.s32.totalorder %s20, 0
      %p68 = por %p66, %p67
      %s70 = sadd.s32 %s69, 1
      %p73 = scmp.eq.s32.totalorder %s14, 1
      %p74 = scmp.ne.s32.totalorder %s69, %s71
      %p75 = scmp.eq.s32.totalorder %s14, 0
      %p76 = por %p74, %p75
      %p77 = scmp.ne.s32.totalorder %s69, %s71
      %p78 = scmp.eq.s32.totalorder %s19, 1
      %p79 = por %p77, %p78
      %p80 = scmp.ne.s32.totalorder %s71, %s72
      %p81 = scmp.eq.s32.totalorder %s19, 0
      %p82 = por %p80, %p81
      %p83 = scmp.ne.s32.totalorder %s71, %s72
      %p84 = scmp.eq.s32.totalorder %s20, 1
      %p85 = por %p83, %p84
      %p87 = scmp.ne.s32.totalorder %s72, %s86
      %p88 = scmp.eq.s32.totalorder %s20, 0
      %p89 = por %p87, %p88
      %s91 = sadd.s32 %s90, 1
      %p94 = scmp.eq.s32.totalorder %s14, 1
      %p95 = scmp.ne.s32.totalorder %s90, %s92
      %p96 = scmp.eq.s32.totalorder %s14, 0
      %p97 = por %p95, %p96
      %p98 = scmp.ne.s32.totalorder %s90, %s92
      %p99 = scmp.eq.s32.totalorder %s19, 1
      %p100 = por %p98, %p99
      %p101 = scmp.ne.s32.totalorder %s92, %s93
      %p102 = scmp.eq.s32.totalorder %s19, 0
      %p103 = por %p101, %p102
      %p104 = scmp.ne.s32.totalorder %s92, %s93
      %p105 = scmp.eq.s32.totalorder %s20, 1
      %p106 = por %p104, %p105
      %p108 = scmp.ne.s32.totalorder %s93, %s107
      %p109 = scmp.eq.s32.totalorder %s20, 0
      %p110 = por %p108, %p109
      %s112 = sadd.s32 %s111, 1
      %p115 = scmp.eq.s32.totalorder %s14, 1
      %p116 = scmp.ne.s32.totalorder %s111, %s113
      %p117 = scmp.eq.s32.totalorder %s14, 0
      %p118 = por %p116, %p117
      %p119 = scmp.ne.s32.totalorder %s111, %s113
      %p120 = scmp.eq.s32.totalorder %s19, 1
      %p121 = por %p119, %p120
      %p122 = scmp.ne.s32.totalorder %s113, %s114
      %p123 = scmp.eq.s32.totalorder %s19, 0
      %p124 = por %p122, %p123
      %p125 = scmp.ne.s32.totalorder %s113, %s114
      %p126 = scmp.eq.s32.totalorder %s20, 1
      %p127 = por %p125, %p126
      %p129 = scmp.ne.s32.totalorder %s114, %s128
      %p130 = scmp.eq.s32.totalorder %s20, 0
      %p131 = por %p129, %p130
      %s132 = ssub.s32 %s14, %s21
      %p133 = scmp.eq.s32.totalorder %s132, 0
      %s135 = sadd.s32 %s134, 1
      %s136 = scalar_select %p133, %s134, %s135
      %p139 = pneg %p133
      %p140 = scmp.eq.s32.totalorder %s14, 1
      %p141 = por %p139, %p140
      %p142 = scmp.ne.s32.totalorder %s134, %s137
      %p143 = scmp.eq.s32.totalorder %s14, 0
      %p144 = por %p142, %p143
      %p145 = scmp.ne.s32.totalorder %s134, %s137
      %p146 = scmp.eq.s32.totalorder %s19, 1
      %p147 = por %p145, %p146
      %p148 = scmp.ne.s32.totalorder %s137, %s138
      %p149 = scmp.eq.s32.totalorder %s19, 0
      %p150 = por %p148, %p149
      %p151 = scmp.ne.s32.totalorder %s137, %s138
      %p152 = scmp.eq.s32.totalorder %s20, 1
      %p153 = por %p151, %p152
      %p155 = scmp.ne.s32.totalorder %s138, %s154
      %p156 = scmp.eq.s32.totalorder %s20, 0
      %p157 = por %p155, %p156
      %p158 = scmp.le.s32.totalorder 1, %s14
      %p159 = scmp.lt.s32.totalorder %s14, 3
      %p160 = pnand %p158, %p159
      %p161 = pneg %p160
      // Predicated region
      $region9: #{tpu_custom_call.1} parent=5 // pred_check
        _
      $region10: #{tpu_custom_call.1} parent=5 // pred_check_branch
        %163 = sbr.rel (%p160) target = $region12
      $region11: #{tpu_custom_call.1} parent=5 // pred_region
        %s164 = ssub.s32 %s14, 1
        // Predicated region
        $region13: #{tpu_custom_call.1} parent=11 // pred_check
          %p165 = pneg %p61
        $region14: #{tpu_custom_call.1} parent=11 // pred_check_branch
          %167 = sbr.rel (%p165) target = $region16
        $region15: #{tpu_custom_call.1} parent=11 // pred_region
          _
        $region16: #{tpu_custom_call.1} parent=11 // pred_fallthru
          _
        // Predicated region
        $region17: #{tpu_custom_call.1} parent=11 // pred_check
          %p168 = pneg %p82
        $region18: #{tpu_custom_call.1} parent=11 // pred_check_branch
          %170 = sbr.rel (%p168) target = $region20
        $region19: #{tpu_custom_call.1} parent=11 // pred_region
          _
        $region20: #{tpu_custom_call.1} parent=11 // pred_fallthru
          _
        // Predicated region
        $region21: #{tpu_custom_call.1} parent=11 // pred_check
          %p171 = pneg %p103
        $region22: #{tpu_custom_call.1} parent=11 // pred_check_branch
          %173 = sbr.rel (%p171) target = $region24
        $region23: #{tpu_custom_call.1} parent=11 // pred_region
          _
        $region24: #{tpu_custom_call.1} parent=11 // pred_fallthru
          _
        // Predicated region
        $region25: #{tpu_custom_call.1} parent=11 // pred_check
          %p174 = pneg %p124
        $region26: #{tpu_custom_call.1} parent=11 // pred_check_branch
          %176 = sbr.rel (%p174) target = $region28
        $region27: #{tpu_custom_call.1} parent=11 // pred_region
          _
        $region28: #{tpu_custom_call.1} parent=11 // pred_fallthru
          _
      $region12: #{tpu_custom_call.1} parent=5 // pred_fallthru
        _
      %p177 = scmp.lt.s32.totalorder %s14, 2
      // Predicated region
      $region29: #{tpu_custom_call.1} parent=5 // pred_check
        %p178 = pneg %p177
      $region30: #{tpu_custom_call.1} parent=5 // pred_check_branch
        %180 = sbr.rel (%p178) target = $region32
      $region31: #{tpu_custom_call.1} parent=5 // pred_region
        // Predicated region
        $region33: #{tpu_custom_call.1} parent=31 // pred_check
          %p181 = pneg %p34
        $region34: #{tpu_custom_call.1} parent=31 // pred_check_branch
          %183 = sbr.rel (%p181) target = $region36
        $region35: #{tpu_custom_call.1} parent=31 // pred_region
          %p184 = scmp.lt.s32.totalorder %s14, 1
          %s185 = scalar_select %p184, %s14, 1
          %s186 = smul.addr %s185, 8
          %s187 = scalar_lea.vmem %s0, %s186
        $region36: #{tpu_custom_call.1} parent=31 // pred_fallthru
          _
      $region32: #{tpu_custom_call.1} parent=5 // pred_fallthru
        _
      %p188 = scmp.le.s32.totalorder 1, %s14
      %p189 = scmp.lt.s32.totalorder %s14, 3
      %p190 = pnand %p188, %p189
      %p191 = pneg %p190
      // Predicated region
      $region37: #{tpu_custom_call.1} parent=5 // pred_check
        _
      $region38: #{tpu_custom_call.1} parent=5 // pred_check_branch
        %193 = sbr.rel (%p190) target = $region40
      $region39: #{tpu_custom_call.1} parent=5 // pred_region
        %s194 = ssub.s32 %s14, 1
        %p195 = scmp.lt.s32.totalorder %s19, 1
        %s196 = scalar_select %p195, %s19, 1
        %s197 = smul.addr %s196, 8
        %s198 = scalar_lea.vmem %s0, %s197
        %p199 = pneg %p40
        %p200 = pneg %p37
        %p201 = pneg %p61
        %p202 = pneg %p58
        %p203 = pneg %p82
        %p204 = pneg %p79
        %p205 = pneg %p103
        %p206 = pneg %p100
        %p207 = pneg %p124
        %p208 = pneg %p121
        %p209 = pneg %p150
        %p210 = pneg %p147
        %s211 = sand.u32 %s137, 1
        %s212 = scalar_lea.sflag [#allocation3], %s211
        %s213 = sand.u32 %s137, 1
        %s214 = smul.addr %s213, 8
        %s215 = scalar_lea.vmem [#allocation2], %s214
        %p216 = scmp.lt.s32.totalorder %s19, 1
        %s217 = scalar_select %p216, %s19, 1
        %s218 = smul.addr %s217, 8
        %s219 = scalar_lea.vmem %s0, %s218
        %v220 = vld [vmem:[%s219] sm:$0xff]
        %v221 = vld [vmem:[%s1] sm:$0xff]
        %v222 = vld [vmem:[%s1 + $0x8] sm:$0xff]
        %v223 = vld [vmem:[%s1 + $0x10] sm:$0xff]
        %v224 = vld [vmem:[%s1 + $0x18] sm:$0xff]
        %v225 = vld [vmem:[%s1 + $0x20] sm:$0xff]
        %v226 = vld [vmem:[%s1 + $0x28] sm:$0xff]
        %v227 = vld [vmem:[%s1 + $0x30] sm:$0xff]
        %v228 = vld [vmem:[%s1 + $0x38] sm:$0xff]
        %v229 = vld [vmem:[%s1 + $0x40] sm:$0xff]
        %v230 = vld [vmem:[%s1 + $0x48] sm:$0xff]
        %v231 = vld [vmem:[%s1 + $0x50] sm:$0xff]
        %v232 = vld [vmem:[%s1 + $0x58] sm:$0xff]
        %v233 = vld [vmem:[%s1 + $0x60] sm:$0xff]
        %v234 = vld [vmem:[%s1 + $0x68] sm:$0xff]
        %v235 = vld [vmem:[%s1 + $0x70] sm:$0xff]
        %v236 = vld [vmem:[%s1 + $0x78] sm:$0xff]
        %v237 = vld [vmem:[%s1 + $0x80] sm:$0xff]
        %v238 = vld [vmem:[%s1 + $0x88] sm:$0xff]
        %v239 = vld [vmem:[%s1 + $0x90] sm:$0xff]
        %v240 = vld [vmem:[%s1 + $0x98] sm:$0xff]
        %v241 = vld [vmem:[%s1 + $0xa0] sm:$0xff]
        %v242 = vld [vmem:[%s1 + $0xa8] sm:$0xff]
        %v243 = vld [vmem:[%s1 + $0xb0] sm:$0xff]
        %v244 = vld [vmem:[%s1 + $0xb8] sm:$0xff]
        %v245 = vld [vmem:[%s1 + $0xc0] sm:$0xff]
        %v246 = vld [vmem:[%s1 + $0xc8] sm:$0xff]
        %v247 = vld [vmem:[%s1 + $0xd0] sm:$0xff]
        %v248 = vld [vmem:[%s1 + $0xd8] sm:$0xff]
        %v249 = vld [vmem:[%s1 + $0xe0] sm:$0xff]
        %v250 = vld [vmem:[%s1 + $0xe8] sm:$0xff]
        %v251 = vld [vmem:[%s1 + $0xf0] sm:$0xff]
        %v252 = vld [vmem:[%s1 + $0xf8] sm:$0xff]
        %v253 = vld [vmem:[%s1 + $0x100] sm:$0xff]
        %v254 = vld [vmem:[%s1 + $0x108] sm:$0xff]
        %v255 = vld [vmem:[%s1 + $0x110] sm:$0xff]
        %v256 = vld [vmem:[%s1 + $0x118] sm:$0xff]
        %v257 = vld [vmem:[%s1 + $0x120] sm:$0xff]
        %v258 = vld [vmem:[%s1 + $0x128] sm:$0xff]
        %v259 = vld [vmem:[%s1 + $0x130] sm:$0xff]
        %v260 = vld [vmem:[%s1 + $0x138] sm:$0xff]
        %v261 = vld [vmem:[%s1 + $0x140] sm:$0xff]
        %v262 = vld [vmem:[%s1 + $0x148] sm:$0xff]
        %v263 = vld [vmem:[%s1 + $0x150] sm:$0xff]
        %v264 = vld [vmem:[%s1 + $0x158] sm:$0xff]
        %v265 = vld [vmem:[%s1 + $0x160] sm:$0xff]
        %v266 = vld [vmem:[%s1 + $0x168] sm:$0xff]
        %v267 = vld [vmem:[%s1 + $0x170] sm:$0xff]
        %v268 = vld [vmem:[%s1 + $0x178] sm:$0xff]
        %v269 = vld [vmem:[%s2] sm:$0x1]
        %v270 = vld [vmem:[%s2 + $0x1] sm:$0x1]
        %v271 = vld [vmem:[%s2 + $0x2] sm:$0x1]
        %v272 = vld [vmem:[%s2 + $0x3] sm:$0x1]
        %v273 = vld [vmem:[%s2 + $0x4] sm:$0x1]
        %v274 = vld [vmem:[%s2 + $0x5] sm:$0x1]
        %v275 = vld [vmem:[%s2 + $0x6] sm:$0x1]
        %v276 = vld [vmem:[%s2 + $0x7] sm:$0x1]
        %v277 = vld [vmem:[%s2 + $0x8] sm:$0x1]
        %v278 = vld [vmem:[%s2 + $0x9] sm:$0x1]
        %v279 = vld [vmem:[%s2 + $0xa] sm:$0x1]
        %v280 = vld [vmem:[%s2 + $0xb] sm:$0x1]
        %v293 = vperm.slane %v269, 0
        %v294 = vperm.slane %v270, 0
        %v295 = vperm.slane %v271, 0
        %v296 = vperm.slane %v272, 0
        %v297 = vperm.slane %v273, 0
        %v298 = vperm.slane %v274, 0
        %v299 = vperm.slane %v275, 0
        %v300 = vperm.slane %v276, 0
        %v301 = vperm.slane %v277, 0
        %v302 = vperm.slane %v278, 0
        %v303 = vperm.slane %v279, 0
        %v304 = vperm.slane %v280, 0
        %vm317 = vcmask 261120
        %v319 = vsel %vm317, %v220, 0
        %321 = vmatpush.msra.mxu0 0.0
        %322 = vmatpush.msra.mxu0 0.0
        %323 = vmatpush.msra.mxu0 0.0
        %324 = vmatpush.msra.mxu0 0.0
        %325 = vmatpush.msra.mxu0 0.0
        %326 = vmatpush.msra.mxu0 0.0
        %327 = vmatpush.msra.mxu0 0.0
        %328 = vmatpush.msra.mxu0 0.0
        %329 = vmatpush.msra.mxu0 0.0
        %330 = vmatpush.msra.mxu0 0.0
        %331 = vmatpush.msra.mxu0 0.0
        %332 = vmatpush.msra.mxu0 0.0
        %333 = vmatpush.msra.mxu0 %v224
        %334 = vmatpush.msra.mxu0 %v223
        %335 = vmatpush.msra.mxu0 %v222
        %336 = vmatpush.msra.mxu0 %v221
        %337 = vmatmul.f32.gmra.mxu0 %v319
        %v338 = vpop.f32.mrf.mxu0
        %v339 = vadd.f32 %v293, %v338
        %340 = vdwg.mxu0
        %341 = vmatpush.msra.mxu0 0.0
        %342 = vmatpush.msra.mxu0 0.0
        %343 = vmatpush.msra.mxu0 0.0
        %344 = vmatpush.msra.mxu0 0.0
        %345 = vmatpush.msra.mxu0 0.0
        %346 = vmatpush.msra.mxu0 0.0
        %347 = vmatpush.msra.mxu0 0.0
        %348 = vmatpush.msra.mxu0 0.0
        %349 = vmatpush.msra.mxu0 0.0
        %350 = vmatpush.msra.mxu0 0.0
        %351 = vmatpush.msra.mxu0 0.0
        %352 = vmatpush.msra.mxu0 0.0
        %353 = vmatpush.msra.mxu0 %v228
        %354 = vmatpush.msra.mxu0 %v227
        %355 = vmatpush.msra.mxu0 %v226
        %356 = vmatpush.msra.mxu0 %v225
        %357 = vmatmul.f32.gmra.mxu0 %v319
        %v358 = vpop.f32.mrf.mxu0
        %v359 = vadd.f32 %v294, %v358
        %360 = vdwg.mxu0
        %361 = vmatpush.msra.mxu0 0.0
        %362 = vmatpush.msra.mxu0 0.0
        %363 = vmatpush.msra.mxu0 0.0
        %364 = vmatpush.msra.mxu0 0.0
        %365 = vmatpush.msra.mxu0 0.0
        %366 = vmatpush.msra.mxu0 0.0
        %367 = vmatpush.msra.mxu0 0.0
        %368 = vmatpush.msra.mxu0 0.0
        %369 = vmatpush.msra.mxu0 0.0
        %370 = vmatpush.msra.mxu0 0.0
        %371 = vmatpush.msra.mxu0 0.0
        %372 = vmatpush.msra.mxu0 0.0
        %373 = vmatpush.msra.mxu0 %v232
        %374 = vmatpush.msra.mxu0 %v231
        %375 = vmatpush.msra.mxu0 %v230
        %376 = vmatpush.msra.mxu0 %v229
        %377 = vmatmul.f32.gmra.mxu0 %v319
        %v378 = vpop.f32.mrf.mxu0
        %v379 = vadd.f32 %v295, %v378
        %380 = vdwg.mxu0
        %381 = vmatpush.msra.mxu0 0.0
        %382 = vmatpush.msra.mxu0 0.0
        %383 = vmatpush.msra.mxu0 0.0
        %384 = vmatpush.msra.mxu0 0.0
        %385 = vmatpush.msra.mxu0 0.0
        %386 = vmatpush.msra.mxu0 0.0
        %387 = vmatpush.msra.mxu0 0.0
        %388 = vmatpush.msra.mxu0 0.0
        %389 = vmatpush.msra.mxu0 0.0
        %390 = vmatpush.msra.mxu0 0.0
        %391 = vmatpush.msra.mxu0 0.0
        %392 = vmatpush.msra.mxu0 0.0
        %393 = vmatpush.msra.mxu0 %v236
        %394 = vmatpush.msra.mxu0 %v235
        %395 = vmatpush.msra.mxu0 %v234
        %396 = vmatpush.msra.mxu0 %v233
        %397 = vmatmul.f32.gmra.mxu0 %v319
        %v398 = vpop.f32.mrf.mxu0
        %v399 = vadd.f32 %v296, %v398
        %400 = vdwg.mxu0
        %401 = vmatpush.msra.mxu0 0.0
        %402 = vmatpush.msra.mxu0 0.0
        %403 = vmatpush.msra.mxu0 0.0
        %404 = vmatpush.msra.mxu0 0.0
        %405 = vmatpush.msra.mxu0 0.0
        %406 = vmatpush.msra.mxu0 0.0
        %407 = vmatpush.msra.mxu0 0.0
        %408 = vmatpush.msra.mxu0 0.0
        %409 = vmatpush.msra.mxu0 0.0
        %410 = vmatpush.msra.mxu0 0.0
        %411 = vmatpush.msra.mxu0 0.0
        %412 = vmatpush.msra.mxu0 0.0
        %413 = vmatpush.msra.mxu0 %v240
        %414 = vmatpush.msra.mxu0 %v239
        %415 = vmatpush.msra.mxu0 %v238
        %416 = vmatpush.msra.mxu0 %v237
        %417 = vmatmul.f32.gmra.mxu0 %v319
        %v418 = vpop.f32.mrf.mxu0
        %v419 = vadd.f32 %v297, %v418
        %420 = vdwg.mxu0
        %421 = vmatpush.msra.mxu0 0.0
        %422 = vmatpush.msra.mxu0 0.0
        %423 = vmatpush.msra.mxu0 0.0
        %424 = vmatpush.msra.mxu0 0.0
        %425 = vmatpush.msra.mxu0 0.0
        %426 = vmatpush.msra.mxu0 0.0
        %427 = vmatpush.msra.mxu0 0.0
        %428 = vmatpush.msra.mxu0 0.0
        %429 = vmatpush.msra.mxu0 0.0
        %430 = vmatpush.msra.mxu0 0.0
        %431 = vmatpush.msra.mxu0 0.0
        %432 = vmatpush.msra.mxu0 0.0
        %433 = vmatpush.msra.mxu0 %v244
        %434 = vmatpush.msra.mxu0 %v243
        %435 = vmatpush.msra.mxu0 %v242
        %436 = vmatpush.msra.mxu0 %v241
        %437 = vmatmul.f32.gmra.mxu0 %v319
        %v438 = vpop.f32.mrf.mxu0
        %v439 = vadd.f32 %v298, %v438
        %440 = vdwg.mxu0
        %441 = vmatpush.msra.mxu0 0.0
        %442 = vmatpush.msra.mxu0 0.0
        %443 = vmatpush.msra.mxu0 0.0
        %444 = vmatpush.msra.mxu0 0.0
        %445 = vmatpush.msra.mxu0 0.0
        %446 = vmatpush.msra.mxu0 0.0
        %447 = vmatpush.msra.mxu0 0.0
        %448 = vmatpush.msra.mxu0 0.0
        %449 = vmatpush.msra.mxu0 0.0
        %450 = vmatpush.msra.mxu0 0.0
        %451 = vmatpush.msra.mxu0 0.0
        %452 = vmatpush.msra.mxu0 0.0
        %453 = vmatpush.msra.mxu0 %v248
        %454 = vmatpush.msra.mxu0 %v247
        %455 = vmatpush.msra.mxu0 %v246
        %456 = vmatpush.msra.mxu0 %v245
        %457 = vmatmul.f32.gmra.mxu0 %v319
        %v458 = vpop.f32.mrf.mxu0
        %v459 = vadd.f32 %v299, %v458
        %460 = vdwg.mxu0
        %461 = vmatpush.msra.mxu0 0.0
        %462 = vmatpush.msra.mxu0 0.0
        %463 = vmatpush.msra.mxu0 0.0
        %464 = vmatpush.msra.mxu0 0.0
        %465 = vmatpush.msra.mxu0 0.0
        %466 = vmatpush.msra.mxu0 0.0
        %467 = vmatpush.msra.mxu0 0.0
        %468 = vmatpush.msra.mxu0 0.0
        %469 = vmatpush.msra.mxu0 0.0
        %470 = vmatpush.msra.mxu0 0.0
        %471 = vmatpush.msra.mxu0 0.0
        %472 = vmatpush.msra.mxu0 0.0
        %473 = vmatpush.msra.mxu0 %v252
        %474 = vmatpush.msra.mxu0 %v251
        %475 = vmatpush.msra.mxu0 %v250
        %476 = vmatpush.msra.mxu0 %v249
        %477 = vmatmul.f32.gmra.mxu0 %v319
        %v478 = vpop.f32.mrf.mxu0
        %v479 = vadd.f32 %v300, %v478
        %480 = vdwg.mxu0
        %481 = vmatpush.msra.mxu0 0.0
        %482 = vmatpush.msra.mxu0 0.0
        %483 = vmatpush.msra.mxu0 0.0
        %484 = vmatpush.msra.mxu0 0.0
        %485 = vmatpush.msra.mxu0 0.0
        %486 = vmatpush.msra.mxu0 0.0
        %487 = vmatpush.msra.mxu0 0.0
        %488 = vmatpush.msra.mxu0 0.0
        %489 = vmatpush.msra.mxu0 0.0
        %490 = vmatpush.msra.mxu0 0.0
        %491 = vmatpush.msra.mxu0 0.0
        %492 = vmatpush.msra.mxu0 0.0
        %493 = vmatpush.msra.mxu0 %v256
        %494 = vmatpush.msra.mxu0 %v255
        %495 = vmatpush.msra.mxu0 %v254
        %496 = vmatpush.msra.mxu0 %v253
        %497 = vmatmul.f32.gmra.mxu0 %v319
        %v498 = vpop.f32.mrf.mxu0
        %v499 = vadd.f32 %v301, %v498
        %500 = vdwg.mxu0
        %501 = vmatpush.msra.mxu0 0.0
        %502 = vmatpush.msra.mxu0 0.0
        %503 = vmatpush.msra.mxu0 0.0
        %504 = vmatpush.msra.mxu0 0.0
        %505 = vmatpush.msra.mxu0 0.0
        %506 = vmatpush.msra.mxu0 0.0
        %507 = vmatpush.msra.mxu0 0.0
        %508 = vmatpush.msra.mxu0 0.0
        %509 = vmatpush.msra.mxu0 0.0
        %510 = vmatpush.msra.mxu0 0.0
        %511 = vmatpush.msra.mxu0 0.0
        %512 = vmatpush.msra.mxu0 0.0
        %513 = vmatpush.msra.mxu0 %v260
        %514 = vmatpush.msra.mxu0 %v259
        %515 = vmatpush.msra.mxu0 %v258
        %516 = vmatpush.msra.mxu0 %v257
        %517 = vmatmul.f32.gmra.mxu0 %v319
        %v518 = vpop.f32.mrf.mxu0
        %v519 = vadd.f32 %v302, %v518
        %520 = vdwg.mxu0
        %521 = vmatpush.msra.mxu0 0.0
        %522 = vmatpush.msra.mxu0 0.0
        %523 = vmatpush.msra.mxu0 0.0
        %524 = vmatpush.msra.mxu0 0.0
        %525 = vmatpush.msra.mxu0 0.0
        %526 = vmatpush.msra.mxu0 0.0
        %527 = vmatpush.msra.mxu0 0.0
        %528 = vmatpush.msra.mxu0 0.0
        %529 = vmatpush.msra.mxu0 0.0
        %530 = vmatpush.msra.mxu0 0.0
        %531 = vmatpush.msra.mxu0 0.0
        %532 = vmatpush.msra.mxu0 0.0
        %533 = vmatpush.msra.mxu0 %v264
        %534 = vmatpush.msra.mxu0 %v263
        %535 = vmatpush.msra.mxu0 %v262
        %536 = vmatpush.msra.mxu0 %v261
        %537 = vmatmul.f32.gmra.mxu0 %v319
        %v538 = vpop.f32.mrf.mxu0
        %v539 = vadd.f32 %v303, %v538
        %540 = vdwg.mxu0
        %541 = vmatpush.msra.mxu0 0.0
        %542 = vmatpush.msra.mxu0 0.0
        %543 = vmatpush.msra.mxu0 0.0
        %544 = vmatpush.msra.mxu0 0.0
        %545 = vmatpush.msra.mxu0 0.0
        %546 = vmatpush.msra.mxu0 0.0
        %547 = vmatpush.msra.mxu0 0.0
        %548 = vmatpush.msra.mxu0 0.0
        %549 = vmatpush.msra.mxu0 0.0
        %550 = vmatpush.msra.mxu0 0.0
        %551 = vmatpush.msra.mxu0 0.0
        %552 = vmatpush.msra.mxu0 0.0
        %553 = vmatpush.msra.mxu0 %v268
        %554 = vmatpush.msra.mxu0 %v267
        %555 = vmatpush.msra.mxu0 %v266
        %556 = vmatpush.msra.mxu0 %v265
        %557 = vmatmul.f32.gmra.mxu0 %v319
        %v558 = vpop.f32.mrf.mxu0
        %v559 = vadd.f32 %v304, %v558
        %560 = vdwg.mxu0
        %vm561 = vcmask 64512
        %v563 = vsel %vm561, %v339, 0
        %v566 = vsel %vm561, %v419, 0
        %568 = vmatpush.xpose.msra.mxu0 0.0
        %569 = vmatpush.xpose.msra.mxu0 0.0
        %570 = vmatpush.xpose.msra.mxu0 0.0
        %571 = vmatpush.xpose.msra.mxu0 0.0
        %572 = vmatpush.xpose.msra.mxu0 0.0
        %573 = vmatpush.xpose.msra.mxu0 0.0
        %574 = vmatpush.xpose.msra.mxu0 0.0
        %575 = vmatpush.xpose.msra.mxu0 0.0
        %576 = vmatpush.xpose.msra.mxu0 0.0
        %577 = vmatpush.xpose.msra.mxu0 0.0
        %578 = vmatpush.xpose.msra.mxu0 0.0
        %579 = vmatpush.xpose.msra.mxu0 0.0
        %580 = vmatpush.xpose.msra.mxu0 0.0
        %581 = vmatpush.xpose.msra.mxu0 0.0
        %582 = vmatpush.xpose.msra.mxu0 0.0
        %583 = vmatpush.xpose.msra.mxu0 %v566
        %584 = vmatmul.f32.gmra.mxu0 %v563
        %v585 = vpop.f32.mrf.mxu0
        %v586 = vadd.f32 0.0, %v585
        %587 = vdwg.mxu0
        %v589 = vsel %vm561, %v359, 0
        %v592 = vsel %vm561, %v439, 0
        %594 = vmatpush.xpose.msra.mxu0 0.0
        %595 = vmatpush.xpose.msra.mxu0 0.0
        %596 = vmatpush.xpose.msra.mxu0 0.0
        %597 = vmatpush.xpose.msra.mxu0 0.0
        %598 = vmatpush.xpose.msra.mxu0 0.0
        %599 = vmatpush.xpose.msra.mxu0 0.0
        %600 = vmatpush.xpose.msra.mxu0 0.0
        %601 = vmatpush.xpose.msra.mxu0 0.0
        %602 = vmatpush.xpose.msra.mxu0 0.0
        %603 = vmatpush.xpose.msra.mxu0 0.0
        %604 = vmatpush.xpose.msra.mxu0 0.0
        %605 = vmatpush.xpose.msra.mxu0 0.0
        %606 = vmatpush.xpose.msra.mxu0 0.0
        %607 = vmatpush.xpose.msra.mxu0 0.0
        %608 = vmatpush.xpose.msra.mxu0 0.0
        %609 = vmatpush.xpose.msra.mxu0 %v592
        %610 = vmatmul.f32.gmra.mxu0 %v589
        %v611 = vpop.f32.mrf.mxu0
        %v612 = vadd.f32 0.0, %v611
        %613 = vdwg.mxu0
        %v615 = vsel %vm561, %v379, 0
        %v618 = vsel %vm561, %v459, 0
        %620 = vmatpush.xpose.msra.mxu0 0.0
        %621 = vmatpush.xpose.msra.mxu0 0.0
        %622 = vmatpush.xpose.msra.mxu0 0.0
        %623 = vmatpush.xpose.msra.mxu0 0.0
        %624 = vmatpush.xpose.msra.mxu0 0.0
        %625 = vmatpush.xpose.msra.mxu0 0.0
        %626 = vmatpush.xpose.msra.mxu0 0.0
        %627 = vmatpush.xpose.msra.mxu0 0.0
        %628 = vmatpush.xpose.msra.mxu0 0.0
        %629 = vmatpush.xpose.msra.mxu0 0.0
        %630 = vmatpush.xpose.msra.mxu0 0.0
        %631 = vmatpush.xpose.msra.mxu0 0.0
        %632 = vmatpush.xpose.msra.mxu0 0.0
        %633 = vmatpush.xpose.msra.mxu0 0.0
        %634 = vmatpush.xpose.msra.mxu0 0.0
        %635 = vmatpush.xpose.msra.mxu0 %v618
        %636 = vmatmul.f32.gmra.mxu0 %v615
        %v637 = vpop.f32.mrf.mxu0
        %v638 = vadd.f32 0.0, %v637
        %639 = vdwg.mxu0
        %v641 = vsel %vm561, %v399, 0
        %v644 = vsel %vm561, %v479, 0
        %646 = vmatpush.xpose.msra.mxu0 0.0
        %647 = vmatpush.xpose.msra.mxu0 0.0
        %648 = vmatpush.xpose.msra.mxu0 0.0
        %649 = vmatpush.xpose.msra.mxu0 0.0
        %650 = vmatpush.xpose.msra.mxu0 0.0
        %651 = vmatpush.xpose.msra.mxu0 0.0
        %652 = vmatpush.xpose.msra.mxu0 0.0
        %653 = vmatpush.xpose.msra.mxu0 0.0
        %654 = vmatpush.xpose.msra.mxu0 0.0
        %655 = vmatpush.xpose.msra.mxu0 0.0
        %656 = vmatpush.xpose.msra.mxu0 0.0
        %657 = vmatpush.xpose.msra.mxu0 0.0
        %658 = vmatpush.xpose.msra.mxu0 0.0
        %659 = vmatpush.xpose.msra.mxu0 0.0
        %660 = vmatpush.xpose.msra.mxu0 0.0
        %661 = vmatpush.xpose.msra.mxu0 %v644
        %662 = vmatmul.f32.gmra.mxu0 %v641
        %v663 = vpop.f32.mrf.mxu0
        %v664 = vadd.f32 0.0, %v663
        %665 = vdwg.mxu0
        %v666 = vsel %vm561, %v586, -inf
        %667 = vmax.xlane.f32.xlu0 %v666
        %v668 = vpop.xlane.xlu0 %667
        %v669 = vsel %vm561, %v612, -inf
        %670 = vmax.xlane.f32.xlu0 %v669
        %v671 = vpop.xlane.xlu0 %670
        %v672 = vsel %vm561, %v638, -inf
        %673 = vmax.xlane.f32.xlu0 %v672
        %v674 = vpop.xlane.xlu0 %673
        %v675 = vsel %vm561, %v664, -inf
        %676 = vmax.xlane.f32.xlu0 %v675
        %v677 = vpop.xlane.xlu0 %676
        %v678 = vsub.f32 %v586, %v668
        %v679 = vsub.f32 %v612, %v671
        %v680 = vsub.f32 %v638, %v674
        %v681 = vsub.f32 %v664, %v677
        %v682 = vmul.f32 %v678, 1.442695
        %v683 = vpow.pop %v682
        %v684 = vmul.f32 %v679, 1.442695
        %v685 = vpow.pop %v684
        %v686 = vmul.f32 %v680, 1.442695
        %v687 = vpow.pop %v686
        %v688 = vmul.f32 %v681, 1.442695
        %v689 = vpow.pop %v688
        %v690 = vsel %vm561, %v683, 0.0
        %691 = vadd.xlane.f32.xlu0 %v690
        %v692 = vpop.xlane.xlu0 %691
        %v693 = vsel %vm561, %v685, 0.0
        %694 = vadd.xlane.f32.xlu0 %v693
        %v695 = vpop.xlane.xlu0 %694
        %v696 = vsel %vm561, %v687, 0.0
        %697 = vadd.xlane.f32.xlu0 %v696
        %v698 = vpop.xlane.xlu0 %697
        %v699 = vsel %vm561, %v689, 0.0
        %700 = vadd.xlane.f32.xlu0 %v699
        %v701 = vpop.xlane.xlu0 %700
        %v702 = vrcp.pop %v692
        %v703 = vmul.f32 %v692, %v702
        %v704 = vsub.f32 1.0, %v703
        %v705 = vmul.f32 %v702, %v704
        %v706 = vadd.f32 %v702, %v705
        %vm707 = vweird.f32 %v692
        %vm708 = vweird.f32 %v702
        %vm709 = vmor %vm707, %vm708
        %v710 = vsel %vm709, %v702, %v706
        %v711 = vand.u32 2147483647, %v692
        %vm712 = vcmp.eq.f32.partialorder %v711, 8.507059e+37
        %v713 = vand.u32 %v692, 2147483648
        %v714 = vor.u32 1.1754944e-38, %v713
        %v715 = vsel %vm712, %v714, %v710
        %v716 = vmul.f32 %v683, %v715
        %v717 = vrcp.pop %v695
        %v718 = vmul.f32 %v695, %v717
        %v719 = vsub.f32 1.0, %v718
        %v720 = vmul.f32 %v717, %v719
        %v721 = vadd.f32 %v717, %v720
        %vm722 = vweird.f32 %v695
        %vm723 = vweird.f32 %v717
        %vm724 = vmor %vm722, %vm723
        %v725 = vsel %vm724, %v717, %v721
        %v726 = vand.u32 2147483647, %v695
        %vm727 = vcmp.eq.f32.partialorder %v726, 8.507059e+37
        %v728 = vand.u32 %v695, 2147483648
        %v729 = vor.u32 1.1754944e-38, %v728
        %v730 = vsel %vm727, %v729, %v725
        %v731 = vmul.f32 %v685, %v730
        %v732 = vrcp.pop %v698
        %v733 = vmul.f32 %v698, %v732
        %v734 = vsub.f32 1.0, %v733
        %v735 = vmul.f32 %v732, %v734
        %v736 = vadd.f32 %v732, %v735
        %vm737 = vweird.f32 %v698
        %vm738 = vweird.f32 %v732
        %vm739 = vmor %vm737, %vm738
        %v740 = vsel %vm739, %v732, %v736
        %v741 = vand.u32 2147483647, %v698
        %vm742 = vcmp.eq.f32.partialorder %v741, 8.507059e+37
        %v743 = vand.u32 %v698, 2147483648
        %v744 = vor.u32 1.1754944e-38, %v743
        %v745 = vsel %vm742, %v744, %v740
        %v746 = vmul.f32 %v687, %v745
        %v747 = vrcp.pop %v701
        %v748 = vmul.f32 %v701, %v747
        %v749 = vsub.f32 1.0, %v748
        %v750 = vmul.f32 %v747, %v749
        %v751 = vadd.f32 %v747, %v750
        %vm752 = vweird.f32 %v701
        %vm753 = vweird.f32 %v747
        %vm754 = vmor %vm752, %vm753
        %v755 = vsel %vm754, %v747, %v751
        %v756 = vand.u32 2147483647, %v701
        %vm757 = vcmp.eq.f32.partialorder %v756, 8.507059e+37
        %v758 = vand.u32 %v701, 2147483648
        %v759 = vor.u32 1.1754944e-38, %v758
        %v760 = vsel %vm757, %v759, %v755
        %v761 = vmul.f32 %v689, %v760
        %v763 = vsel %vm561, %v716, 0
        %765 = vmatpush.msra.mxu0 0.0
        %766 = vmatpush.msra.mxu0 0.0
        %767 = vmatpush.msra.mxu0 0.0
        %768 = vmatpush.msra.mxu0 0.0
        %769 = vmatpush.msra.mxu0 0.0
        %770 = vmatpush.msra.mxu0 0.0
        %771 = vmatpush.msra.mxu0 0.0
        %772 = vmatpush.msra.mxu0 0.0
        %773 = vmatpush.msra.mxu0 0.0
        %774 = vmatpush.msra.mxu0 0.0
        %775 = vmatpush.msra.mxu0 0.0
        %776 = vmatpush.msra.mxu0 0.0
        %777 = vmatpush.msra.mxu0 0.0
        %778 = vmatpush.msra.mxu0 0.0
        %779 = vmatpush.msra.mxu0 0.0
        %780 = vmatpush.msra.mxu0 %v499
        %781 = vmatmul.f32.gmra.mxu0 %v763
        %v782 = vpop.f32.mrf.mxu0
        %v783 = vadd.f32 0.0, %v782
        %784 = vdwg.mxu0
        %v786 = vsel %vm561, %v731, 0
        %788 = vmatpush.msra.mxu0 0.0
        %789 = vmatpush.msra.mxu0 0.0
        %790 = vmatpush.msra.mxu0 0.0
        %791 = vmatpush.msra.mxu0 0.0
        %792 = vmatpush.msra.mxu0 0.0
        %793 = vmatpush.msra.mxu0 0.0
        %794 = vmatpush.msra.mxu0 0.0
        %795 = vmatpush.msra.mxu0 0.0
        %796 = vmatpush.msra.mxu0 0.0
        %797 = vmatpush.msra.mxu0 0.0
        %798 = vmatpush.msra.mxu0 0.0
        %799 = vmatpush.msra.mxu0 0.0
        %800 = vmatpush.msra.mxu0 0.0
        %801 = vmatpush.msra.mxu0 0.0
        %802 = vmatpush.msra.mxu0 0.0
        %803 = vmatpush.msra.mxu0 %v519
        %804 = vmatmul.f32.gmra.mxu0 %v786
        %v805 = vpop.f32.mrf.mxu0
        %v806 = vadd.f32 0.0, %v805
        %807 = vdwg.mxu0
        %v809 = vsel %vm561, %v746, 0
        %811 = vmatpush.msra.mxu0 0.0
        %812 = vmatpush.msra.mxu0 0.0
        %813 = vmatpush.msra.mxu0 0.0
        %814 = vmatpush.msra.mxu0 0.0
        %815 = vmatpush.msra.mxu0 0.0
        %816 = vmatpush.msra.mxu0 0.0
        %817 = vmatpush.msra.mxu0 0.0
        %818 = vmatpush.msra.mxu0 0.0
        %819 = vmatpush.msra.mxu0 0.0
        %820 = vmatpush.msra.mxu0 0.0
        %821 = vmatpush.msra.mxu0 0.0
        %822 = vmatpush.msra.mxu0 0.0
        %823 = vmatpush.msra.mxu0 0.0
        %824 = vmatpush.msra.mxu0 0.0
        %825 = vmatpush.msra.mxu0 0.0
        %826 = vmatpush.msra.mxu0 %v539
        %827 = vmatmul.f32.gmra.mxu0 %v809
        %v828 = vpop.f32.mrf.mxu0
        %v829 = vadd.f32 0.0, %v828
        %830 = vdwg.mxu0
        %v832 = vsel %vm561, %v761, 0
        %834 = vmatpush.msra.mxu0 0.0
        %835 = vmatpush.msra.mxu0 0.0
        %836 = vmatpush.msra.mxu0 0.0
        %837 = vmatpush.msra.mxu0 0.0
        %838 = vmatpush.msra.mxu0 0.0
        %839 = vmatpush.msra.mxu0 0.0
        %840 = vmatpush.msra.mxu0 0.0
        %841 = vmatpush.msra.mxu0 0.0
        %842 = vmatpush.msra.mxu0 0.0
        %843 = vmatpush.msra.mxu0 0.0
        %844 = vmatpush.msra.mxu0 0.0
        %845 = vmatpush.msra.mxu0 0.0
        %846 = vmatpush.msra.mxu0 0.0
        %847 = vmatpush.msra.mxu0 0.0
        %848 = vmatpush.msra.mxu0 0.0
        %849 = vmatpush.msra.mxu0 %v559
        %850 = vmatmul.f32.gmra.mxu0 %v832
        %v851 = vpop.f32.mrf.mxu0
        %v852 = vadd.f32 0.0, %v851
        %853 = vdwg.mxu0
        %855 = vrot.lane.b32.xlu0 %v806, 8
        %v856 = vpop.permute.xlu0 %855
        %859 = vrot.lane.b32.xlu0 %v829, 16
        %v860 = vpop.permute.xlu0 %859
        %863 = vrot.lane.b32.xlu0 %v852, 24
        %v864 = vpop.permute.xlu0 %863
        %v866 = vsel %vm561, %v783, %v856
        %vm867 = vcmask 130048
        %v868 = vsel %vm867, %v866, %v860
        %vm869 = vcmask 195584
        %v870 = vsel %vm869, %v868, %v864
        %v871 = vld [vmem:[%s3] sm:$0xff]
        %v872 = vld [vmem:[%s3 + $0x8] sm:$0xff]
        %v873 = vld [vmem:[%s3 + $0x10] sm:$0xff]
        %v874 = vld [vmem:[%s3 + $0x18] sm:$0xff]
        %v875 = vld [vmem:[%s4] sm:$0x1]
        %v876 = vld [vmem:[%s4 + $0x1] sm:$0x1]
        %v877 = vld [vmem:[%s4 + $0x2] sm:$0x1]
        %v878 = vperm.slane %v875, 0
        %v880 = vsel %vm317, %v870, 0
        %882 = vmatpush.msra.mxu0 0.0
        %883 = vmatpush.msra.mxu0 0.0
        %884 = vmatpush.msra.mxu0 0.0
        %885 = vmatpush.msra.mxu0 0.0
        %886 = vmatpush.msra.mxu0 0.0
        %887 = vmatpush.msra.mxu0 0.0
        %888 = vmatpush.msra.mxu0 0.0
        %889 = vmatpush.msra.mxu0 0.0
        %890 = vmatpush.msra.mxu0 0.0
        %891 = vmatpush.msra.mxu0 0.0
        %892 = vmatpush.msra.mxu0 0.0
        %893 = vmatpush.msra.mxu0 0.0
        %894 = vmatpush.msra.mxu0 %v874
        %895 = vmatpush.msra.mxu0 %v873
        %896 = vmatpush.msra.mxu0 %v872
        %897 = vmatpush.msra.mxu0 %v871
        %898 = vmatmul.f32.gmra.mxu0 %v880
        %v899 = vpop.f32.mrf.mxu0
        %v900 = vadd.f32 %v878, %v899
        %901 = vdwg.mxu0
        %v902 = vadd.f32 %v900, %v220
        %v903 = vsel %vm317, %v902, 0.0
        %904 = vadd.xlane.f32.xlu0 %v903
        %v905 = vpop.xlane.xlu0 %904
        %v906 = vrcp.pop 32.0
        %v907 = vmul.f32 32.0, %v906
        %v908 = vsub.f32 1.0, %v907
        %v909 = vmul.f32 %v906, %v908
        %v910 = vadd.f32 %v906, %v909
        %vm911 = vweird.f32 %v906
        %v912 = vsel %vm911, %v906, %v910
        %v913 = vmul.f32 %v905, %v912
        %v914 = vsub.f32 %v902, %v913
        %v915 = vmul.f32 %v914, %v914
        %v916 = vsel %vm317, %v915, 0.0
        %917 = vadd.xlane.f32.xlu0 %v916
        %v918 = vpop.xlane.xlu0 %917
        %v919 = vmul.f32 %v918, %v912
        %v920 = vadd.f32 %v919, 1e-12
        %v921 = vrsqrt.pop %v920
        %v922 = vmul.f32 %v921, %v920
        %v923 = vmul.f32 %v922, %v921
        %v924 = vmul.f32 0.5, %v923
        %v925 = vsub.f32 1.5, %v924
        %v926 = vmul.f32 %v921, %v925
        %vm927 = vweird.f32 %v920
        %vm928 = vweird.f32 %v921
        %vm929 = vmor %vm927, %vm928
        %v930 = vsel %vm929, %v921, %v926
        %v931 = vmul.f32 %v914, %v930
        %v932 = vperm.slane %v876, 0
        %v933 = vmul.f32 %v931, %v932
        %v934 = vperm.slane %v877, 0
        %v935 = vadd.f32 %v933, %v934
        %936 = vst.msk [vmem:[%s215] sm:$0xff] %vm317, %v935
        %s937 = sand.u32 %s137, 1
        %s938 = scalar_lea.sflag [#allocation3], %s937
        %s939 = sand.u32 %s137, 1
        %s940 = smul.addr %s939, 8
        %s941 = scalar_lea.vmem [#allocation2], %s940
        // Predicated region
        $region41: #{tpu_custom_call.1} parent=39 // pred_check
          %p942 = pneg %p147
        $region42: #{tpu_custom_call.1} parent=39 // pred_check_branch
          %944 = sbr.rel (%p942) target = $region44
        $region43: #{tpu_custom_call.1} parent=39 // pred_region
          %946 = vsyncadd %s938, 0
          %s947 = smul.addr %s19, 8
          %s948 = scalar_lea.hbm %s5, %s947
          %s950 = sshll.u32 %s941, 4
          %s951 = int_to_ptr.vmem [resolvable:$true] %s950
          %s952 = sshll.u32 %s948, 4
          %s953 = int_to_ptr.hbm [resolvable:$true] %s952
          %955 = dma.vmem_to_hbm [thread:$0]  %s951, 128, %s953, %s938
        $region44: #{tpu_custom_call.1} parent=39 // pred_fallthru
          _
      $region40: #{tpu_custom_call.1} parent=5 // pred_fallthru
        _
      %p956 = scmp.le.s32.totalorder 2, %s14
      // Predicated region
      $region45: #{tpu_custom_call.1} parent=5 // pred_check
        %p957 = pneg %p956
      $region46: #{tpu_custom_call.1} parent=5 // pred_check_branch
        %959 = sbr.rel (%p957) target = $region48
      $region47: #{tpu_custom_call.1} parent=5 // pred_region
        %s960 = ssub.s32 %s14, 2
        // Predicated region
        $region49: #{tpu_custom_call.1} parent=47 // pred_check
          %p961 = pneg %p153
        $region50: #{tpu_custom_call.1} parent=47 // pred_check_branch
          %963 = sbr.rel (%p961) target = $region52
        $region51: #{tpu_custom_call.1} parent=47 // pred_region
          %s964 = sand.u32 %s138, 1
          %s965 = scalar_lea.sflag [#allocation3], %s964
          %s966 = sand.u32 %s138, 1
          %s967 = smul.addr %s966, 8
          %s968 = scalar_lea.vmem [#allocation2], %s967
          %970 = dma.done %s965, 128
        $region52: #{tpu_custom_call.1} parent=47 // pred_fallthru
          _
      $region48: #{tpu_custom_call.1} parent=5 // pred_fallthru
        _
    $region6: #{tpu_custom_call.1} parent=1 // loop_footer
      %s18 = sadd.s32 1, %s14
    $region7: #{tpu_custom_call.1} parent=1 // loop_footer_branch
      %13 = sbr.rel target = $region3
    $region8: #{tpu_custom_call.1} parent=1 // loop_exit
      _
    %971 = vsyncpa [#allocation3], 1
    %s972 = scalar_lea.sflag [#allocation3], 1
    %973 = vsyncpa %s972, 1

</llo_original>
